<compile_context>
chip_gen: v7x
topology: tpu7x:2x2x1
jax: 0.10.0
libtpu: 0.0.40
codegen_flags: <defaults>
</compile_context>

<pallas_src>
import jax
import jax.numpy as jnp
from jax.experimental import pallas as pl
from jax.experimental.pallas import tpu as pltpu

LANE = 128


def _round_up(x, m):
    return (x + m - 1) // m * m


def _pick_tile(n_pad, cap):
    """Largest multiple of 128 that divides n_pad and is <= cap (>= 128)."""
    cap = max(LANE, min(cap, n_pad))
    best = LANE
    t = LANE
    while t <= cap:
        if n_pad % t == 0:
            best = t
        t += LANE
    return best


def gcn_layer_kernel(a_ref, xs_ref, d_dst_ref, w_ref, b_ref, o_ref, acc_ref):
    """One GCN layer: relu( diag(d) @ (A @ Xs) @ W + b ).

    Xs is already the D^-1/2-scaled (source side) input, in bf16.
    Grid = (destination-row blocks i, source/reduction blocks k, innermost);
    acc_ref is a resident f32 VMEM accumulator with pl.when init/finalize.
    """
    k = pl.program_id(1)

    @pl.when(k == 0)
    def _():
        acc_ref[...] = jnp.zeros_like(acc_ref)

    # int8 0/1 adjacency tile -> bf16 (exact); bf16 x bf16 -> f32 on the MXU.
    a_blk = a_ref[...].astype(jnp.bfloat16)
    acc_ref[...] += jnp.dot(a_blk, xs_ref[...],
                            preferred_element_type=jnp.float32)

    @pl.when(k == pl.num_programs(1) - 1)
    def _():
        h = d_dst_ref[...] * acc_ref[...]                      # (TM, F_in) f32
        h = jnp.dot(h, w_ref[...],
                    preferred_element_type=jnp.float32) + b_ref[...]
        o_ref[...] = jnp.maximum(h, 0.0)


def gcn_layer(a, xs, d, w, b, *, tm, tk):
    """Tiled pallas_call for one GCN layer on padded operands.

    a:  (N_pad, N_pad) int8 0/1 adjacency (with self loops)
    xs: (N_pad, F_in)  bf16 activations, pre-scaled by D^-1/2 (source side)
    d:  (N_pad, 1)     f32 D^-1/2 (zero on padded rows)
    w:  (F_in, F_out)  f32, b: (1, F_out) f32
    """
    n_pad = a.shape[0]
    f_in = xs.shape[1]
    f_out = w.shape[1]
    grid = (n_pad // tm, n_pad // tk)

    return pl.pallas_call(
        gcn_layer_kernel,
        out_shape=jax.ShapeDtypeStruct((n_pad, f_out), jnp.float32),
        grid_spec=pltpu.PrefetchScalarGridSpec(
            num_scalar_prefetch=0,
            grid=grid,
            in_specs=[
                pl.BlockSpec((tm, tk), lambda i, k: (i, k)),       # A tile
                pl.BlockSpec((tk, f_in), lambda i, k: (k, 0)),     # Xs src rows
                pl.BlockSpec((tm, 1), lambda i, k: (i, 0)),        # d^-1/2 dst
                pl.BlockSpec((f_in, f_out), lambda i, k: (0, 0)),  # W resident
                pl.BlockSpec((1, f_out), lambda i, k: (0, 0)),     # b resident
            ],
            out_specs=pl.BlockSpec((tm, f_out), lambda i, k: (i, 0)),
            scratch_shapes=[pltpu.VMEM((tm, f_in), jnp.float32)],
        ),
        compiler_params=pltpu.CompilerParams(
            # Destination-row blocks shard across TensorCores (v7x megacore);
            # the source/reduction axis is innermost and sequential.
            dimension_semantics=("parallel", "arbitrary"),
            # Safe on v7x (64 MiB physical / 32 MiB default scoped) and raises
            # the 16 MiB default scoped limit on v5e.  On v6e (128 MiB VMEM)
            # TK could grow to 2048 with a 64 MiB limit.
            vmem_limit_bytes=32 * 1024 * 1024,
        ),
    )(a, xs, d, w, b)


def encoder_forward(x, edge_index, w1, b1, w2, b2):
    """relu(GCNConv(x)) -> relu(GCNConv(.)) with PyG gcn_norm semantics."""
    n, c_in = x.shape
    c_hid = w1.shape[1]
    c_out = w2.shape[1]

    src, dst = edge_index[0], edge_index[1]
    n_pad = _round_up(n, LANE)

    # ---- O(E) glue: int8 0/1 adjacency (+ self loops) and D^-1/2 ---------
    # Assumes edge_index has no duplicate edges / pre-existing self loops
    # (same assumption as the plain-JAX reference).
    # Padded diagonal 1s are harmless: padded rows of Xs and entries of d are 0.
    # TODO(synk): for sparse graphs at large N, skip all-zero A tiles via
    # PrefetchScalarGridSpec CSR-style per-row-block column lists instead of
    # streaming the dense N^2 adjacency.
    a_p = jnp.eye(n_pad, dtype=jnp.int8).at[dst, src].set(jnp.int8(1))
    deg = jnp.ones((n,), jnp.float32).at[dst].add(1.0)   # incl. self loop
    d_inv_sqrt = jax.lax.rsqrt(deg)

    # ---- lane padding of feature dims ------------------------------------
    c_in_p = _round_up(c_in, LANE)
    c_hid_p = _round_up(c_hid, LANE)
    c_out_p = _round_up(c_out, LANE)

    d_p = jnp.zeros((n_pad, 1), jnp.float32).at[:n, 0].set(d_inv_sqrt)
    x_p = jnp.zeros((n_pad, c_in_p), jnp.float32).at[:n, :c_in].set(x)
    w1_p = jnp.zeros((c_in_p, c_hid_p), jnp.float32).at[:c_in, :c_hid].set(w1)
    b1_p = jnp.zeros((1, c_hid_p), jnp.float32).at[:, :c_hid].set(
        b1.reshape(1, c_hid))
    w2_p = jnp.zeros((c_hid_p, c_out_p), jnp.float32).at[:c_hid, :c_out].set(w2)
    b2_p = jnp.zeros((1, c_out_p), jnp.float32).at[:, :c_out].set(
        b2.reshape(1, c_out))

    # ---- tile choice (v7x-safe; keep >= 2 row blocks for megacore) -------
    tm_cap = n_pad // 2 if n_pad >= 2 * LANE else n_pad
    tm = _pick_tile(n_pad, min(2048, tm_cap))
    tk = _pick_tile(n_pad, 1024)

    # Fold the source-side D^-1/2 into the activations once per layer (cheap
    # O(N*F) op) and ship them bf16; the kernel streams int8 A + bf16 Xs.
    xs1 = (d_p * x_p).astype(jnp.bfloat16)
    h = gcn_layer(a_p, xs1, d_p, w1_p, b1_p, tm=tm, tk=tk)    # (N_pad, 128)
    xs2 = (d_p * h).astype(jnp.bfloat16)
    out = gcn_layer(a_p, xs2, d_p, w2_p, b2_p, tm=tm, tk=tk)  # (N_pad, 128)
    return out[:n, :c_out]


# ---------------------------- test helpers --------------------------------
def gcn_reference(x, edge_index, w1, b1, w2, b2):
    """Plain-JAX f32 reference of the same GCN math (PyG gcn_norm)."""
    n = x.shape[0]
    a = jnp.zeros((n, n), jnp.float32).at[edge_index[1], edge_index[0]].set(1.0)
    a = a + jnp.eye(n, dtype=jnp.float32)
    deg = jnp.sum(a, axis=1)
    dis = jax.lax.rsqrt(deg)
    a_norm = dis[:, None] * a * dis[None, :]
    h = jnp.maximum(a_norm @ (x @ w1) + b1[None, :], 0.0)
    return jnp.maximum(a_norm @ (h @ w2) + b2[None, :], 0.0)


def ring_edges(n, offsets):
    """Bidirectional ring(s) with the given hop offsets: unique, no self loops."""
    idx = jnp.arange(n, dtype=jnp.int32)
    srcs, dsts = [], []
    for off in offsets:
        nxt = (idx + off) % n
        srcs += [idx, nxt]
        dsts += [nxt, idx]
    return jnp.stack([jnp.concatenate(srcs), jnp.concatenate(dsts)], axis=0)


def glorot(key, shape):
    fan_in, fan_out = shape
    lim = jnp.sqrt(6.0 / (fan_in + fan_out))
    return jax.random.uniform(key, shape, jnp.float32, -lim, lim)


if __name__ == "__main__":
    C_IN, C_HID, C_OUT = 8, 128, 64
    key = jax.random.PRNGKey(0)
    kw1, kw2, kx1, kx2 = jax.random.split(key, 4)

    # Parameters (GCNConv: glorot weights, zero-init bias).
    w1 = glorot(kw1, (C_IN, C_HID))
    b1 = jnp.zeros((C_HID,), jnp.float32)
    w2 = glorot(kw2, (C_HID, C_OUT))
    b2 = jnp.zeros((C_OUT,), jnp.float32)

    fwd = jax.jit(encoder_forward)

    # Case 1: tiny graph (1x1 grid).
    n1 = 16
    x1 = jax.random.normal(kx1, (n1, C_IN), jnp.float32)
    e1 = ring_edges(n1, (1,))
    out1 = jax.block_until_ready(fwd(x1, e1, w1, b1, w2, b2))
    ref1 = gcn_reference(x1, e1, w1, b1, w2, b2)
    assert out1.shape == (n1, C_OUT)
    assert jnp.allclose(out1, ref1, atol=1e-2, rtol=1e-2), (
        float(jnp.max(jnp.abs(out1 - ref1))))

    # Case 2: larger graph so the multi-block (i, k) accumulation path runs
    # (n_pad = 1152 -> tm = tk = 384 -> 3x3 grid: exercises pl.when init /
    # finalize across k and output revisits across i).
    n2 = 1100
    x2 = jax.random.normal(kx2, (n2, C_IN), jnp.float32)
    e2 = ring_edges(n2, (1, 7))
    out2 = jax.block_until_ready(fwd(x2, e2, w1, b1, w2, b2))
    ref2 = gcn_reference(x2, e2, w1, b1, w2, b2)
    assert out2.shape == (n2, C_OUT)
    assert jnp.allclose(out2, ref2, atol=1e-2, rtol=1e-2), (
        float(jnp.max(jnp.abs(out2 - ref2))))

    print("KERNEL_OK")
</pallas_src>

<mosaic_0001>
module attributes {stable_mosaic.version = 11 : i64} {
  func.func private @main(%arg0: i32) attributes {dimension_semantics = [#tpu.dimension_semantics<core_parallel>], iteration_bounds = array<i64: 2>, tpu.core_type = #tpu.core_type<sc_scalar_subcore>, window_params = []} {
    return
  }
}

module attributes {stable_mosaic.version = 11 : i64} {
  func.func private @main(%arg0: i32) attributes {dimension_semantics = [#tpu.dimension_semantics<core_parallel>], iteration_bounds = array<i64: 2>, tpu.core_type = #tpu.core_type<sc_scalar_subcore>, window_params = []} {
    return
  }
}

module attributes {stable_mosaic.version = 11 : i64} {
  func.func @gcn_layer_kernel(%arg0: i32, %arg1: i32, %arg2: memref<128x128xi8, #tpu.memory_space<vmem>>, %arg3: memref<128x128xbf16, #tpu.memory_space<vmem>>, %arg4: memref<128x1xf32, #tpu.memory_space<vmem>>, %arg5: memref<128x128xf32, #tpu.memory_space<vmem>>, %arg6: memref<1x128xf32, #tpu.memory_space<vmem>>, %arg7: memref<128x128xf32, #tpu.memory_space<vmem>>, %arg8: memref<128x128xf32, #tpu.memory_space<vmem>>) attributes {dimension_semantics = [#tpu.dimension_semantics<parallel>, #tpu.dimension_semantics<arbitrary>], iteration_bounds = array<i64: 1, 1>, scalar_prefetch = 0 : i64, scratch_operands = 1 : i64, tpu.core_type = #tpu.core_type<tc>, window_params = [{transform_indices = @transform_0, window_bounds = array<i64: 128, 128>}, {transform_indices = @transform_1, window_bounds = array<i64: 128, 128>}, {transform_indices = @transform_2, window_bounds = array<i64: 128, 1>}, {pipeline_mode = #tpu.pipeline_mode<synchronous>, transform_indices = @transform_3, window_bounds = array<i64: 128, 128>}, {pipeline_mode = #tpu.pipeline_mode<synchronous>, transform_indices = @transform_4, window_bounds = array<i64: 1, 128>}, {transform_indices = @transform_5, window_bounds = array<i64: 128, 128>}]} {
    %c0_i32 = arith.constant 0 : i32
    %0 = arith.cmpi eq, %arg1, %c0_i32 : i32
    %1 = arith.extui %0 : i1 to i32
    %c0_i32_0 = arith.constant 0 : i32
    %2 = arith.cmpi ne, %1, %c0_i32_0 : i32
    scf.if %2 {
      %cst_10 = arith.constant 0.000000e+00 : f32
      %13 = vector.broadcast %cst_10 : f32 to vector<128x128xf32>
      %c0_11 = arith.constant 0 : index
      %c0_12 = arith.constant 0 : index
      %14 = vector.load %arg8[%c0_11, %c0_12] : memref<128x128xf32, #tpu.memory_space<vmem>>, vector<128x128xf32>
      tpu.vector_store %arg8[%c0_11, %c0_12], %13 {strides = array<i32>} : memref<128x128xf32, #tpu.memory_space<vmem>>, vector<128x128xf32>,
    } else {
    }
    %c0 = arith.constant 0 : index
    %c0_1 = arith.constant 0 : index
    %3 = vector.load %arg2[%c0, %c0_1] : memref<128x128xi8, #tpu.memory_space<vmem>>, vector<128x128xi8>
    %4 = arith.sitofp %3 : vector<128x128xi8> to vector<128x128xbf16>
    %c0_2 = arith.constant 0 : index
    %c0_3 = arith.constant 0 : index
    %5 = vector.load %arg8[%c0_2, %c0_3] : memref<128x128xf32, #tpu.memory_space<vmem>>, vector<128x128xf32>
    %c0_4 = arith.constant 0 : index
    %c0_5 = arith.constant 0 : index
    %6 = vector.load %arg3[%c0_4, %c0_5] : memref<128x128xbf16, #tpu.memory_space<vmem>>, vector<128x128xbf16>
    %cst = arith.constant dense<0.000000e+00> : vector<128x128xf32>
    %7 = tpu.matmul %4, %6, %cst {dimension_numbers = #tpu.dot_dimension_numbers<[1], [0], [0], [1], [0, 0, 1, 1], [], []>} : vector<128x128xbf16>, vector<128x128xbf16>, vector<128x128xf32> -> vector<128x128xf32>
    %8 = arith.addf %5, %7 : vector<128x128xf32>
    %c0_6 = arith.constant 0 : index
    %c0_7 = arith.constant 0 : index
    %9 = vector.load %arg8[%c0_6, %c0_7] : memref<128x128xf32, #tpu.memory_space<vmem>>, vector<128x128xf32>
    tpu.vector_store %arg8[%c0_6, %c0_7], %8 {strides = array<i32>} : memref<128x128xf32, #tpu.memory_space<vmem>>, vector<128x128xf32>,
    %c0_i32_8 = arith.constant 0 : i32
    %10 = arith.cmpi eq, %arg1, %c0_i32_8 : i32
    %11 = arith.extui %10 : i1 to i32
    %c0_i32_9 = arith.constant 0 : i32
    %12 = arith.cmpi ne, %11, %c0_i32_9 : i32
    scf.if %12 {
      %c0_10 = arith.constant 0 : index
      %c0_11 = arith.constant 0 : index
      %13 = vector.load %arg4[%c0_10, %c0_11] : memref<128x1xf32, #tpu.memory_space<vmem>>, vector<128x1xf32>
      %c0_12 = arith.constant 0 : index
      %c0_13 = arith.constant 0 : index
      %14 = vector.load %arg8[%c0_12, %c0_13] : memref<128x128xf32, #tpu.memory_space<vmem>>, vector<128x128xf32>
      %15 = vector.broadcast %13 : vector<128x1xf32> to vector<128x128xf32>
      %16 = arith.mulf %15, %14 : vector<128x128xf32>
      %c0_14 = arith.constant 0 : index
      %c0_15 = arith.constant 0 : index
      %17 = vector.load %arg5[%c0_14, %c0_15] : memref<128x128xf32, #tpu.memory_space<vmem>>, vector<128x128xf32>
      %cst_16 = arith.constant dense<0.000000e+00> : vector<128x128xf32>
      %18 = tpu.matmul %16, %17, %cst_16 {dimension_numbers = #tpu.dot_dimension_numbers<[1], [0], [0], [1], [0, 0, 1, 1], [], []>} : vector<128x128xf32>, vector<128x128xf32>, vector<128x128xf32> -> vector<128x128xf32>
      %c0_17 = arith.constant 0 : index
      %c0_18 = arith.constant 0 : index
      %19 = vector.load %arg6[%c0_17, %c0_18] : memref<1x128xf32, #tpu.memory_space<vmem>>, vector<1x128xf32>
      %20 = vector.broadcast %19 : vector<1x128xf32> to vector<128x128xf32>
      %21 = arith.addf %18, %20 : vector<128x128xf32>
      %cst_19 = arith.constant 0.000000e+00 : f32
      %22 = vector.broadcast %cst_19 : f32 to vector<128x128xf32>
      %23 = arith.maximumf %21, %22 : vector<128x128xf32>
      %c0_20 = arith.constant 0 : index
      %c0_21 = arith.constant 0 : index
      %24 = vector.load %arg7[%c0_20, %c0_21] : memref<128x128xf32, #tpu.memory_space<vmem>>, vector<128x128xf32>
      tpu.vector_store %arg7[%c0_20, %c0_21], %23 {strides = array<i32>} : memref<128x128xf32, #tpu.memory_space<vmem>>, vector<128x128xf32>,
    } else {
    }
    return
  }
  func.func @transform_0(%arg0: i32, %arg1: i32) -> (i32, i32) {
    %c0_i32 = arith.constant 0 : i32
    return %arg0, %arg1 : i32, i32
  }
  func.func @transform_1(%arg0: i32, %arg1: i32) -> (i32, i32) {
    %c0_i32 = arith.constant 0 : i32
    %c0_i32_0 = arith.constant 0 : i32
    return %arg1, %c0_i32 : i32, i32
  }
  func.func @transform_2(%arg0: i32, %arg1: i32) -> (i32, i32) {
    %c0_i32 = arith.constant 0 : i32
    %c0_i32_0 = arith.constant 0 : i32
    return %arg0, %c0_i32 : i32, i32
  }
  func.func @transform_3(%arg0: i32, %arg1: i32) -> (i32, i32) {
    %c0_i32 = arith.constant 0 : i32
    %c0_i32_0 = arith.constant 0 : i32
    %c0_i32_1 = arith.constant 0 : i32
    return %c0_i32, %c0_i32_0 : i32, i32
  }
  func.func @transform_4(%arg0: i32, %arg1: i32) -> (i32, i32) {
    %c0_i32 = arith.constant 0 : i32
    %c0_i32_0 = arith.constant 0 : i32
    %c0_i32_1 = arith.constant 0 : i32
    return %c0_i32, %c0_i32_0 : i32, i32
  }
  func.func @transform_5(%arg0: i32, %arg1: i32) -> (i32, i32) {
    %c0_i32 = arith.constant 0 : i32
    %c0_i32_0 = arith.constant 0 : i32
    return %arg0, %c0_i32 : i32, i32
  }
}

</mosaic_0001>

<llo_original>
// kernel: encoder_forward.2
$region0: #{encoder_forward.2}
  #allocation0 [shape = 'u32[]', space=smem, size = 0x4, offset = 0x4, fixed_abs, tag = 'smem constant byte address 0x4 - core index']
  #allocation1 [shape = 'u32[144,128]{1,0:T(1,128)}', space=vmem, size = 0x12000, scoped, tag = 'internal scratch']
  #allocation2 [shape = 'f32[128,128]{1,0:T(8,128)}', space=vmem, size = 0x10000, scoped, tag = 'scratch operand']
  %s0 = inlined_call_operand.vmem [shape: s8[128,128], index: 0, kind: input, shape index: {}]
  %s1 = inlined_call_operand.vmem [shape: bf16[128,128], index: 1, kind: input, shape index: {}]
  %s2 = inlined_call_operand.vmem [shape: f32[128,1], index: 2, kind: input, shape index: {}]
  %s3 = inlined_call_operand.vmem [shape: f32[128,128], index: 3, kind: input, shape index: {}]
  %s4 = inlined_call_operand.vmem [shape: f32[1,128], index: 4, kind: input, shape index: {}]
  %s5 = inlined_call_operand.vmem [shape: f32[128,128], index: 5, kind: output, shape index: {}]
  %s6 = sld [smem:[#allocation0]]
  $region38: #{encoder_forward.2} parent=0
    _
  %s8 = ssub.s32 1, %s6
  %s9 = scalar_select 0, %s8, %s6
  // Predicated region
  $region2: #{encoder_forward.2} parent=0 // pred_check
    _
  $region3: #{encoder_forward.2} parent=0 // pred_check_branch
    %11 = sbr.rel (0) target = $region5
  $region4: #{encoder_forward.2} parent=0 // pred_region
    _
  $region5: #{encoder_forward.2} parent=0 // pred_fallthru
    _
  // Predicated region
  $region6: #{encoder_forward.2} parent=0 // pred_check
    _
  $region7: #{encoder_forward.2} parent=0 // pred_check_branch
    %13 = sbr.rel (0) target = $region9
  $region8: #{encoder_forward.2} parent=0 // pred_region
    _
  $region9: #{encoder_forward.2} parent=0 // pred_fallthru
    _
  // Predicated region
  $region10: #{encoder_forward.2} parent=0 // pred_check
    _
  $region11: #{encoder_forward.2} parent=0 // pred_check_branch
    %15 = sbr.rel (0) target = $region13
  $region12: #{encoder_forward.2} parent=0 // pred_region
    _
  $region13: #{encoder_forward.2} parent=0 // pred_fallthru
    _
  // Predicated region
  $region14: #{encoder_forward.2} parent=0 // pred_check
    _
  $region15: #{encoder_forward.2} parent=0 // pred_check_branch
    %17 = sbr.rel (0) target = $region17
  $region16: #{encoder_forward.2} parent=0 // pred_region
    _
  $region17: #{encoder_forward.2} parent=0 // pred_fallthru
    _
  // Predicated region
  $region18: #{encoder_forward.2} parent=0 // pred_check
    _
  $region19: #{encoder_forward.2} parent=0 // pred_check_branch
    %19 = sbr.rel (0) target = $region21
  $region20: #{encoder_forward.2} parent=0 // pred_region
    _
  $region21: #{encoder_forward.2} parent=0 // pred_fallthru
    _
  %p21 = scmp.eq.s32.totalorder 0, 0
  // Predicated region
  $region22: #{encoder_forward.2} parent=0 // pred_check
    %p22 = pneg %p21
  $region23: #{encoder_forward.2} parent=0 // pred_check_branch
    %24 = sbr.rel (%p22) target = $region25
  $region24: #{encoder_forward.2} parent=0 // pred_region
    %25 = vst [vmem:[#allocation2] sm:$0xff] 0.0
    %26 = vst [vmem:[#allocation2 + $0x8] sm:$0xff] 0.0
    %27 = vst [vmem:[#allocation2 + $0x10] sm:$0xff] 0.0
    %28 = vst [vmem:[#allocation2 + $0x18] sm:$0xff] 0.0
    %29 = vst [vmem:[#allocation2 + $0x20] sm:$0xff] 0.0
    %30 = vst [vmem:[#allocation2 + $0x28] sm:$0xff] 0.0
    %31 = vst [vmem:[#allocation2 + $0x30] sm:$0xff] 0.0
    %32 = vst [vmem:[#allocation2 + $0x38] sm:$0xff] 0.0
    %33 = vst [vmem:[#allocation2 + $0x40] sm:$0xff] 0.0
    %34 = vst [vmem:[#allocation2 + $0x48] sm:$0xff] 0.0
    %35 = vst [vmem:[#allocation2 + $0x50] sm:$0xff] 0.0
    %36 = vst [vmem:[#allocation2 + $0x58] sm:$0xff] 0.0
    %37 = vst [vmem:[#allocation2 + $0x60] sm:$0xff] 0.0
    %38 = vst [vmem:[#allocation2 + $0x68] sm:$0xff] 0.0
    %39 = vst [vmem:[#allocation2 + $0x70] sm:$0xff] 0.0
    %40 = vst [vmem:[#allocation2 + $0x78] sm:$0xff] 0.0
  $region25: #{encoder_forward.2} parent=0 // pred_fallthru
    _
  %v41 = vld [vmem:[%s0] sm:$0x3]
  %v42 = vld [vmem:[%s0 + $0x2] sm:$0x3]
  %v43 = vld [vmem:[%s0 + $0x4] sm:$0x3]
  %v44 = vld [vmem:[%s0 + $0x6] sm:$0x3]
  %v45 = vld [vmem:[%s0 + $0x8] sm:$0x3]
  %v46 = vld [vmem:[%s0 + $0xa] sm:$0x3]
  %v47 = vld [vmem:[%s0 + $0xc] sm:$0x3]
  %v48 = vld [vmem:[%s0 + $0xe] sm:$0x3]
  %v49 = vld [vmem:[%s0 + $0x10] sm:$0x3]
  %v50 = vld [vmem:[%s0 + $0x12] sm:$0x3]
  %v51 = vld [vmem:[%s0 + $0x14] sm:$0x3]
  %v52 = vld [vmem:[%s0 + $0x16] sm:$0x3]
  %v53 = vld [vmem:[%s0 + $0x18] sm:$0x3]
  %v54 = vld [vmem:[%s0 + $0x1a] sm:$0x3]
  %v55 = vld [vmem:[%s0 + $0x1c] sm:$0x3]
  %v56 = vld [vmem:[%s0 + $0x1e] sm:$0x3]
  %v57 = vunpack.c.l.s8.bf16 %v41
  %v58 = vunpack.c.l.s8.bf16 %v42
  %v59 = vunpack.c.l.s8.bf16 %v43
  %v60 = vunpack.c.l.s8.bf16 %v44
  %v61 = vunpack.c.l.s8.bf16 %v45
  %v62 = vunpack.c.l.s8.bf16 %v46
  %v63 = vunpack.c.l.s8.bf16 %v47
  %v64 = vunpack.c.l.s8.bf16 %v48
  %v65 = vunpack.c.l.s8.bf16 %v49
  %v66 = vunpack.c.l.s8.bf16 %v50
  %v67 = vunpack.c.l.s8.bf16 %v51
  %v68 = vunpack.c.l.s8.bf16 %v52
  %v69 = vunpack.c.l.s8.bf16 %v53
  %v70 = vunpack.c.l.s8.bf16 %v54
  %v71 = vunpack.c.l.s8.bf16 %v55
  %v72 = vunpack.c.l.s8.bf16 %v56
  %v73 = vld [vmem:[#allocation2] sm:$0xff]
  %v74 = vld [vmem:[#allocation2 + $0x8] sm:$0xff]
  %v75 = vld [vmem:[#allocation2 + $0x10] sm:$0xff]
  %v76 = vld [vmem:[#allocation2 + $0x18] sm:$0xff]
  %v77 = vld [vmem:[#allocation2 + $0x20] sm:$0xff]
  %v78 = vld [vmem:[#allocation2 + $0x28] sm:$0xff]
  %v79 = vld [vmem:[#allocation2 + $0x30] sm:$0xff]
  %v80 = vld [vmem:[#allocation2 + $0x38] sm:$0xff]
  %v81 = vld [vmem:[#allocation2 + $0x40] sm:$0xff]
  %v82 = vld [vmem:[#allocation2 + $0x48] sm:$0xff]
  %v83 = vld [vmem:[#allocation2 + $0x50] sm:$0xff]
  %v84 = vld [vmem:[#allocation2 + $0x58] sm:$0xff]
  %v85 = vld [vmem:[#allocation2 + $0x60] sm:$0xff]
  %v86 = vld [vmem:[#allocation2 + $0x68] sm:$0xff]
  %v87 = vld [vmem:[#allocation2 + $0x70] sm:$0xff]
  %v88 = vld [vmem:[#allocation2 + $0x78] sm:$0xff]
  %v89 = vld [vmem:[%s1] sm:$0xf]
  %v90 = vld [vmem:[%s1 + $0x4] sm:$0xf]
  %v91 = vld [vmem:[%s1 + $0x8] sm:$0xf]
  %v92 = vld [vmem:[%s1 + $0xc] sm:$0xf]
  %v93 = vld [vmem:[%s1 + $0x10] sm:$0xf]
  %v94 = vld [vmem:[%s1 + $0x14] sm:$0xf]
  %v95 = vld [vmem:[%s1 + $0x18] sm:$0xf]
  %v96 = vld [vmem:[%s1 + $0x1c] sm:$0xf]
  %v97 = vld [vmem:[%s1 + $0x20] sm:$0xf]
  %v98 = vld [vmem:[%s1 + $0x24] sm:$0xf]
  %v99 = vld [vmem:[%s1 + $0x28] sm:$0xf]
  %v100 = vld [vmem:[%s1 + $0x2c] sm:$0xf]
  %v101 = vld [vmem:[%s1 + $0x30] sm:$0xf]
  %v102 = vld [vmem:[%s1 + $0x34] sm:$0xf]
  %v103 = vld [vmem:[%s1 + $0x38] sm:$0xf]
  %v104 = vld [vmem:[%s1 + $0x3c] sm:$0xf]
  %v121 = vunpack.c.l.b16 %v57
  %v122 = vunpack.c.l.b16 %v58
  %v123 = vunpack.c.l.b16 %v59
  %v124 = vunpack.c.l.b16 %v60
  %v125 = vunpack.c.l.b16 %v61
  %v126 = vunpack.c.l.b16 %v62
  %v127 = vunpack.c.l.b16 %v63
  %v128 = vunpack.c.l.b16 %v64
  %v129 = vunpack.c.l.b16 %v65
  %v130 = vunpack.c.l.b16 %v66
  %v131 = vunpack.c.l.b16 %v67
  %v132 = vunpack.c.l.b16 %v68
  %v133 = vunpack.c.l.b16 %v69
  %v134 = vunpack.c.l.b16 %v70
  %v135 = vunpack.c.l.b16 %v71
  %v136 = vunpack.c.l.b16 %v72
  %v137 = vpack.c.b16 %v122, %v121
  %v138 = vpack.c.b16 %v124, %v123
  %v139 = vpack.c.b16 %v126, %v125
  %v140 = vpack.c.b16 %v128, %v127
  %v141 = vpack.c.b16 %v130, %v129
  %v142 = vpack.c.b16 %v132, %v131
  %v143 = vpack.c.b16 %v134, %v133
  %v144 = vpack.c.b16 %v136, %v135
  %v169 = vunpack.c.l.b16 %v89
  %v170 = vunpack.c.l.b16 %v90
  %v171 = vunpack.c.l.b16 %v91
  %v172 = vunpack.c.l.b16 %v92
  %v173 = vunpack.c.l.b16 %v93
  %v174 = vunpack.c.l.b16 %v94
  %v175 = vunpack.c.l.b16 %v95
  %v176 = vunpack.c.l.b16 %v96
  %v177 = vunpack.c.l.b16 %v97
  %v178 = vunpack.c.l.b16 %v98
  %v179 = vunpack.c.l.b16 %v99
  %v180 = vunpack.c.l.b16 %v100
  %v181 = vunpack.c.l.b16 %v101
  %v182 = vunpack.c.l.b16 %v102
  %v183 = vunpack.c.l.b16 %v103
  %v184 = vunpack.c.l.b16 %v104
  %v185 = vpack.c.b16 %v170, %v169
  %v186 = vpack.c.b16 %v172, %v171
  %v187 = vpack.c.b16 %v174, %v173
  %v188 = vpack.c.b16 %v176, %v175
  %v189 = vpack.c.b16 %v178, %v177
  %v190 = vpack.c.b16 %v180, %v179
  %v191 = vpack.c.b16 %v182, %v181
  %v192 = vpack.c.b16 %v184, %v183
  %201 = vmatprep.subr.bf16.mxu0 0
  %202 = vmatpush1.bf16.msra.mxu0 %v185
  %203 = vmatprep.subr.bf16.mxu0 0
  %204 = vmatpush1.bf16.msra.mxu0 %v186
  %205 = vmatprep.subr.bf16.mxu0 0
  %206 = vmatpush1.bf16.msra.mxu0 %v187
  %207 = vmatprep.subr.bf16.mxu0 0
  %208 = vmatpush1.bf16.msra.mxu0 %v188
  %209 = vmatprep.subr.bf16.mxu0 0
  %210 = vmatpush1.bf16.msra.mxu0 %v189
  %211 = vmatprep.subr.bf16.mxu0 0
  %212 = vmatpush1.bf16.msra.mxu0 %v190
  %213 = vmatprep.subr.bf16.mxu0 0
  %214 = vmatpush1.bf16.msra.mxu0 %v191
  %215 = vmatprep.subr.bf16.mxu0 0
  %216 = vmatpush1.bf16.msra.mxu0 %v192
  %217 = vmatprep.subr.bf16.mxu0 0
  %218 = vmatpush1.bf16.msra.mxu0 0
  %219 = vmatprep.subr.bf16.mxu0 0
  %220 = vmatpush1.bf16.msra.mxu0 0
  %221 = vmatprep.subr.bf16.mxu0 0
  %222 = vmatpush1.bf16.msra.mxu0 0
  %223 = vmatprep.subr.bf16.mxu0 0
  %224 = vmatpush1.bf16.msra.mxu0 0
  %225 = vmatprep.subr.bf16.mxu0 0
  %226 = vmatpush1.bf16.msra.mxu0 0
  %227 = vmatprep.subr.bf16.mxu0 0
  %228 = vmatpush1.bf16.msra.mxu0 0
  %229 = vmatprep.subr.bf16.mxu0 0
  %230 = vmatpush1.bf16.msra.mxu0 0
  %231 = vmatprep.subr.bf16.mxu0 0
  %232 = vmatpush1.bf16.msra.mxu0 0
  %233 = vmatprep.mubr.bf16.mxu0 0
  %234 = vmatmul.mubr.bf16.gmra.mrb[0].mxu0 %v137
  %v235 = vpop.f32.mrb[0].mxu0
  %v236 = vadd.f32 0.0, %v235
  %v237 = vpop.f32.mrb[0].mxu0
  %v238 = vpop.f32.mrb[0].mxu0
  %v239 = vadd.f32 0.0, %v238
  %v240 = vpop.f32.mrb[0].mxu0
  %241 = vmatprep.mubr.bf16.mxu0 0
  %242 = vmatmul.mubr.bf16.gmra.mrb[0].mxu0 %v138
  %v243 = vpop.f32.mrb[0].mxu0
  %v244 = vadd.f32 0.0, %v243
  %v245 = vpop.f32.mrb[0].mxu0
  %v246 = vpop.f32.mrb[0].mxu0
  %v247 = vadd.f32 0.0, %v246
  %v248 = vpop.f32.mrb[0].mxu0
  %249 = vmatprep.mubr.bf16.mxu0 0
  %250 = vmatmul.mubr.bf16.gmra.mrb[0].mxu0 %v139
  %v251 = vpop.f32.mrb[0].mxu0
  %v252 = vadd.f32 0.0, %v251
  %v253 = vpop.f32.mrb[0].mxu0
  %v254 = vpop.f32.mrb[0].mxu0
  %v255 = vadd.f32 0.0, %v254
  %v256 = vpop.f32.mrb[0].mxu0
  %257 = vmatprep.mubr.bf16.mxu0 0
  %258 = vmatmul.mubr.bf16.gmra.mrb[0].mxu0 %v140
  %v259 = vpop.f32.mrb[0].mxu0
  %v260 = vadd.f32 0.0, %v259
  %v261 = vpop.f32.mrb[0].mxu0
  %v262 = vpop.f32.mrb[0].mxu0
  %v263 = vadd.f32 0.0, %v262
  %v264 = vpop.f32.mrb[0].mxu0
  %265 = vmatprep.mubr.bf16.mxu0 0
  %266 = vmatmul.mubr.bf16.gmra.mrb[0].mxu0 %v141
  %v267 = vpop.f32.mrb[0].mxu0
  %v268 = vadd.f32 0.0, %v267
  %v269 = vpop.f32.mrb[0].mxu0
  %v270 = vpop.f32.mrb[0].mxu0
  %v271 = vadd.f32 0.0, %v270
  %v272 = vpop.f32.mrb[0].mxu0
  %273 = vmatprep.mubr.bf16.mxu0 0
  %274 = vmatmul.mubr.bf16.gmra.mrb[0].mxu0 %v142
  %v275 = vpop.f32.mrb[0].mxu0
  %v276 = vadd.f32 0.0, %v275
  %v277 = vpop.f32.mrb[0].mxu0
  %v278 = vpop.f32.mrb[0].mxu0
  %v279 = vadd.f32 0.0, %v278
  %v280 = vpop.f32.mrb[0].mxu0
  %281 = vmatprep.mubr.bf16.mxu0 0
  %282 = vmatmul.mubr.bf16.gmra.mrb[0].mxu0 %v143
  %v283 = vpop.f32.mrb[0].mxu0
  %v284 = vadd.f32 0.0, %v283
  %v285 = vpop.f32.mrb[0].mxu0
  %v286 = vpop.f32.mrb[0].mxu0
  %v287 = vadd.f32 0.0, %v286
  %v288 = vpop.f32.mrb[0].mxu0
  %289 = vmatprep.mubr.bf16.mxu0 0
  %290 = vmatmul.mubr.bf16.gmra.mrb[0].mxu0 %v144
  %v291 = vpop.f32.mrb[0].mxu0
  %v292 = vadd.f32 0.0, %v291
  %v293 = vpop.f32.mrb[0].mxu0
  %v294 = vpop.f32.mrb[0].mxu0
  %v295 = vadd.f32 0.0, %v294
  %v296 = vpop.f32.mrb[0].mxu0
  %297 = vdwg.mxu0
  %v298 = vadd.f32 %v73, %v236
  %v299 = vadd.f32 %v74, %v239
  %v300 = vadd.f32 %v75, %v244
  %v301 = vadd.f32 %v76, %v247
  %v302 = vadd.f32 %v77, %v252
  %v303 = vadd.f32 %v78, %v255
  %v304 = vadd.f32 %v79, %v260
  %v305 = vadd.f32 %v80, %v263
  %v306 = vadd.f32 %v81, %v268
  %v307 = vadd.f32 %v82, %v271
  %v308 = vadd.f32 %v83, %v276
  %v309 = vadd.f32 %v84, %v279
  %v310 = vadd.f32 %v85, %v284
  %v311 = vadd.f32 %v86, %v287
  %v312 = vadd.f32 %v87, %v292
  %v313 = vadd.f32 %v88, %v295
  %314 = vst [vmem:[#allocation2] sm:$0xff] %v298
  %315 = vst [vmem:[#allocation2 + $0x8] sm:$0xff] %v299
  %316 = vst [vmem:[#allocation2 + $0x10] sm:$0xff] %v300
  %317 = vst [vmem:[#allocation2 + $0x18] sm:$0xff] %v301
  %318 = vst [vmem:[#allocation2 + $0x20] sm:$0xff] %v302
  %319 = vst [vmem:[#allocation2 + $0x28] sm:$0xff] %v303
  %320 = vst [vmem:[#allocation2 + $0x30] sm:$0xff] %v304
  %321 = vst [vmem:[#allocation2 + $0x38] sm:$0xff] %v305
  %322 = vst [vmem:[#allocation2 + $0x40] sm:$0xff] %v306
  %323 = vst [vmem:[#allocation2 + $0x48] sm:$0xff] %v307
  %324 = vst [vmem:[#allocation2 + $0x50] sm:$0xff] %v308
  %325 = vst [vmem:[#allocation2 + $0x58] sm:$0xff] %v309
  %326 = vst [vmem:[#allocation2 + $0x60] sm:$0xff] %v310
  %327 = vst [vmem:[#allocation2 + $0x68] sm:$0xff] %v311
  %328 = vst [vmem:[#allocation2 + $0x70] sm:$0xff] %v312
  %329 = vst [vmem:[#allocation2 + $0x78] sm:$0xff] %v313
  // Predicated region
  $region26: #{encoder_forward.2} parent=0 // pred_check
    %p330 = pneg %p21
  $region27: #{encoder_forward.2} parent=0 // pred_check_branch
    %332 = sbr.rel (%p330) target = $region29
  $region28: #{encoder_forward.2} parent=0 // pred_region
    %v333 = vld [vmem:[%s2] sm:$0xff]
    %v334 = vld [vmem:[%s2 + $0x8] sm:$0xff]
    %v335 = vld [vmem:[%s2 + $0x10] sm:$0xff]
    %v336 = vld [vmem:[%s2 + $0x18] sm:$0xff]
    %v337 = vld [vmem:[%s2 + $0x20] sm:$0xff]
    %v338 = vld [vmem:[%s2 + $0x28] sm:$0xff]
    %v339 = vld [vmem:[%s2 + $0x30] sm:$0xff]
    %v340 = vld [vmem:[%s2 + $0x38] sm:$0xff]
    %v341 = vld [vmem:[%s2 + $0x40] sm:$0xff]
    %v342 = vld [vmem:[%s2 + $0x48] sm:$0xff]
    %v343 = vld [vmem:[%s2 + $0x50] sm:$0xff]
    %v344 = vld [vmem:[%s2 + $0x58] sm:$0xff]
    %v345 = vld [vmem:[%s2 + $0x60] sm:$0xff]
    %v346 = vld [vmem:[%s2 + $0x68] sm:$0xff]
    %v347 = vld [vmem:[%s2 + $0x70] sm:$0xff]
    %v348 = vld [vmem:[%s2 + $0x78] sm:$0xff]
    %v349 = vld [vmem:[#allocation2] sm:$0xff]
    %v350 = vld [vmem:[#allocation2 + $0x8] sm:$0xff]
    %v351 = vld [vmem:[#allocation2 + $0x10] sm:$0xff]
    %v352 = vld [vmem:[#allocation2 + $0x18] sm:$0xff]
    %v353 = vld [vmem:[#allocation2 + $0x20] sm:$0xff]
    %v354 = vld [vmem:[#allocation2 + $0x28] sm:$0xff]
    %v355 = vld [vmem:[#allocation2 + $0x30] sm:$0xff]
    %v356 = vld [vmem:[#allocation2 + $0x38] sm:$0xff]
    %v357 = vld [vmem:[#allocation2 + $0x40] sm:$0xff]
    %v358 = vld [vmem:[#allocation2 + $0x48] sm:$0xff]
    %v359 = vld [vmem:[#allocation2 + $0x50] sm:$0xff]
    %v360 = vld [vmem:[#allocation2 + $0x58] sm:$0xff]
    %v361 = vld [vmem:[#allocation2 + $0x60] sm:$0xff]
    %v362 = vld [vmem:[#allocation2 + $0x68] sm:$0xff]
    %v363 = vld [vmem:[#allocation2 + $0x70] sm:$0xff]
    %v364 = vld [vmem:[#allocation2 + $0x78] sm:$0xff]
    %366 = vset.pattern.permute.xlu0 0
    %367 = vperm.xlu0 %366, %v333
    %v368 = vpop.permute.xlu0 %367
    %371 = vset.pattern.permute.xlu0 0
    %372 = vperm.xlu0 %371, %v334
    %v373 = vpop.permute.xlu0 %372
    %376 = vset.pattern.permute.xlu0 0
    %377 = vperm.xlu0 %376, %v335
    %v378 = vpop.permute.xlu0 %377
    %381 = vset.pattern.permute.xlu0 0
    %382 = vperm.xlu0 %381, %v336
    %v383 = vpop.permute.xlu0 %382
    %386 = vset.pattern.permute.xlu0 0
    %387 = vperm.xlu0 %386, %v337
    %v388 = vpop.permute.xlu0 %387
    %391 = vset.pattern.permute.xlu0 0
    %392 = vperm.xlu0 %391, %v338
    %v393 = vpop.permute.xlu0 %392
    %396 = vset.pattern.permute.xlu0 0
    %397 = vperm.xlu0 %396, %v339
    %v398 = vpop.permute.xlu0 %397
    %401 = vset.pattern.permute.xlu0 0
    %402 = vperm.xlu0 %401, %v340
    %v403 = vpop.permute.xlu0 %402
    %406 = vset.pattern.permute.xlu0 0
    %407 = vperm.xlu0 %406, %v341
    %v408 = vpop.permute.xlu0 %407
    %411 = vset.pattern.permute.xlu0 0
    %412 = vperm.xlu0 %411, %v342
    %v413 = vpop.permute.xlu0 %412
    %416 = vset.pattern.permute.xlu0 0
    %417 = vperm.xlu0 %416, %v343
    %v418 = vpop.permute.xlu0 %417
    %421 = vset.pattern.permute.xlu0 0
    %422 = vperm.xlu0 %421, %v344
    %v423 = vpop.permute.xlu0 %422
    %426 = vset.pattern.permute.xlu0 0
    %427 = vperm.xlu0 %426, %v345
    %v428 = vpop.permute.xlu0 %427
    %431 = vset.pattern.permute.xlu0 0
    %432 = vperm.xlu0 %431, %v346
    %v433 = vpop.permute.xlu0 %432
    %436 = vset.pattern.permute.xlu0 0
    %437 = vperm.xlu0 %436, %v347
    %v438 = vpop.permute.xlu0 %437
    %441 = vset.pattern.permute.xlu0 0
    %442 = vperm.xlu0 %441, %v348
    %v443 = vpop.permute.xlu0 %442
    %v445 = vmul.f32 %v368, %v349
    %v446 = vmul.f32 %v373, %v350
    %v447 = vmul.f32 %v378, %v351
    %v448 = vmul.f32 %v383, %v352
    %v449 = vmul.f32 %v388, %v353
    %v450 = vmul.f32 %v393, %v354
    %v451 = vmul.f32 %v398, %v355
    %v452 = vmul.f32 %v403, %v356
    %v453 = vmul.f32 %v408, %v357
    %v454 = vmul.f32 %v413, %v358
    %v455 = vmul.f32 %v418, %v359
    %v456 = vmul.f32 %v423, %v360
    %v457 = vmul.f32 %v428, %v361
    %v458 = vmul.f32 %v433, %v362
    %v459 = vmul.f32 %v438, %v363
    %v460 = vmul.f32 %v443, %v364
    %v461 = vld [vmem:[%s3] sm:$0xff]
    %v462 = vld [vmem:[%s3 + $0x8] sm:$0xff]
    %v463 = vld [vmem:[%s3 + $0x10] sm:$0xff]
    %v464 = vld [vmem:[%s3 + $0x18] sm:$0xff]
    %v465 = vld [vmem:[%s3 + $0x20] sm:$0xff]
    %v466 = vld [vmem:[%s3 + $0x28] sm:$0xff]
    %v467 = vld [vmem:[%s3 + $0x30] sm:$0xff]
    %v468 = vld [vmem:[%s3 + $0x38] sm:$0xff]
    %v469 = vld [vmem:[%s3 + $0x40] sm:$0xff]
    %v470 = vld [vmem:[%s3 + $0x48] sm:$0xff]
    %v471 = vld [vmem:[%s3 + $0x50] sm:$0xff]
    %v472 = vld [vmem:[%s3 + $0x58] sm:$0xff]
    %v473 = vld [vmem:[%s3 + $0x60] sm:$0xff]
    %v474 = vld [vmem:[%s3 + $0x68] sm:$0xff]
    %v475 = vld [vmem:[%s3 + $0x70] sm:$0xff]
    %v476 = vld [vmem:[%s3 + $0x78] sm:$0xff]
    %v477 = vld [vmem:[%s4] sm:$0x1]
    %v479 = vlaneseq
    %v480 = vshrl.u32 %v479, 7
    %v481 = vsub.s32 0, %v480
    %v482 = vrot.slane %v477, %v481
    %484 = vmatprep.subr.mxu0 0.0
    %485 = vmatpush1.msra.mxu0 %v461
    %486 = vmatprep.subr.mxu0 0.0
    %487 = vmatpush1.msra.mxu0 %v462
    %488 = vmatprep.subr.mxu0 0.0
    %489 = vmatpush1.msra.mxu0 %v463
    %490 = vmatprep.subr.mxu0 0.0
    %491 = vmatpush1.msra.mxu0 %v464
    %492 = vmatprep.subr.mxu0 0.0
    %493 = vmatpush1.msra.mxu0 %v465
    %494 = vmatprep.subr.mxu0 0.0
    %495 = vmatpush1.msra.mxu0 %v466
    %496 = vmatprep.subr.mxu0 0.0
    %497 = vmatpush1.msra.mxu0 %v467
    %498 = vmatprep.subr.mxu0 0.0
    %499 = vmatpush1.msra.mxu0 %v468
    %500 = vmatprep.subr.mxu0 0.0
    %501 = vmatpush1.msra.mxu0 %v469
    %502 = vmatprep.subr.mxu0 0.0
    %503 = vmatpush1.msra.mxu0 %v470
    %504 = vmatprep.subr.mxu0 0.0
    %505 = vmatpush1.msra.mxu0 %v471
    %506 = vmatprep.subr.mxu0 0.0
    %507 = vmatpush1.msra.mxu0 %v472
    %508 = vmatprep.subr.mxu0 0.0
    %509 = vmatpush1.msra.mxu0 %v473
    %510 = vmatprep.subr.mxu0 0.0
    %511 = vmatpush1.msra.mxu0 %v474
    %512 = vmatprep.subr.mxu0 0.0
    %513 = vmatpush1.msra.mxu0 %v475
    %514 = vmatprep.subr.mxu0 0.0
    %515 = vmatpush1.msra.mxu0 %v476
    %516 = vmatprep.subr.mxu0 0.0
    %517 = vmatpush1.msra.mxu0 0.0
    %518 = vmatprep.subr.mxu0 0.0
    %519 = vmatpush1.msra.mxu0 0.0
    %520 = vmatprep.subr.mxu0 0.0
    %521 = vmatpush1.msra.mxu0 0.0
    %522 = vmatprep.subr.mxu0 0.0
    %523 = vmatpush1.msra.mxu0 0.0
    %524 = vmatprep.subr.mxu0 0.0
    %525 = vmatpush1.msra.mxu0 0.0
    %526 = vmatprep.subr.mxu0 0.0
    %527 = vmatpush1.msra.mxu0 0.0
    %528 = vmatprep.subr.mxu0 0.0
    %529 = vmatpush1.msra.mxu0 0.0
    %530 = vmatprep.subr.mxu0 0.0
    %531 = vmatpush1.msra.mxu0 0.0
    %532 = vmatprep.subr.mxu0 0.0
    %533 = vmatpush1.msra.mxu0 0.0
    %534 = vmatprep.subr.mxu0 0.0
    %535 = vmatpush1.msra.mxu0 0.0
    %536 = vmatprep.subr.mxu0 0.0
    %537 = vmatpush1.msra.mxu0 0.0
    %538 = vmatprep.subr.mxu0 0.0
    %539 = vmatpush1.msra.mxu0 0.0
    %540 = vmatprep.subr.mxu0 0.0
    %541 = vmatpush1.msra.mxu0 0.0
    %542 = vmatprep.subr.mxu0 0.0
    %543 = vmatpush1.msra.mxu0 0.0
    %544 = vmatprep.subr.mxu0 0.0
    %545 = vmatpush1.msra.mxu0 0.0
    %546 = vmatprep.subr.mxu0 0.0
    %547 = vmatpush1.msra.mxu0 0.0
    %548 = vmatprep.mubr.f32.mxu0 0.0
    %549 = vmatmul.mubr.f32.gmra.mrb[0].mxu0 %v445
    %v550 = vpop.f32.mrb[0].mxu0
    %v551 = vadd.f32 %v482, %v550
    %v552 = vpop.f32.mrb[0].mxu0
    %553 = vmatprep.mubr.f32.mxu0 0.0
    %554 = vmatmul.mubr.f32.gmra.mrb[0].mxu0 %v446
    %v555 = vpop.f32.mrb[0].mxu0
    %v556 = vadd.f32 %v482, %v555
    %v557 = vpop.f32.mrb[0].mxu0
    %558 = vmatprep.mubr.f32.mxu0 0.0
    %559 = vmatmul.mubr.f32.gmra.mrb[0].mxu0 %v447
    %v560 = vpop.f32.mrb[0].mxu0
    %v561 = vadd.f32 %v482, %v560
    %v562 = vpop.f32.mrb[0].mxu0
    %563 = vmatprep.mubr.f32.mxu0 0.0
    %564 = vmatmul.mubr.f32.gmra.mrb[0].mxu0 %v448
    %v565 = vpop.f32.mrb[0].mxu0
    %v566 = vadd.f32 %v482, %v565
    %v567 = vpop.f32.mrb[0].mxu0
    %568 = vmatprep.mubr.f32.mxu0 0.0
    %569 = vmatmul.mubr.f32.gmra.mrb[0].mxu0 %v449
    %v570 = vpop.f32.mrb[0].mxu0
    %v571 = vadd.f32 %v482, %v570
    %v572 = vpop.f32.mrb[0].mxu0
    %573 = vmatprep.mubr.f32.mxu0 0.0
    %574 = vmatmul.mubr.f32.gmra.mrb[0].mxu0 %v450
    %v575 = vpop.f32.mrb[0].mxu0
    %v576 = vadd.f32 %v482, %v575
    %v577 = vpop.f32.mrb[0].mxu0
    %578 = vmatprep.mubr.f32.mxu0 0.0
    %579 = vmatmul.mubr.f32.gmra.mrb[0].mxu0 %v451
    %v580 = vpop.f32.mrb[0].mxu0
    %v581 = vadd.f32 %v482, %v580
    %v582 = vpop.f32.mrb[0].mxu0
    %583 = vmatprep.mubr.f32.mxu0 0.0
    %584 = vmatmul.mubr.f32.gmra.mrb[0].mxu0 %v452
    %v585 = vpop.f32.mrb[0].mxu0
    %v586 = vadd.f32 %v482, %v585
    %v587 = vpop.f32.mrb[0].mxu0
    %588 = vmatprep.mubr.f32.mxu0 0.0
    %589 = vmatmul.mubr.f32.gmra.mrb[0].mxu0 %v453
    %v590 = vpop.f32.mrb[0].mxu0
    %v591 = vadd.f32 %v482, %v590
    %v592 = vpop.f32.mrb[0].mxu0
    %593 = vmatprep.mubr.f32.mxu0 0.0
    %594 = vmatmul.mubr.f32.gmra.mrb[0].mxu0 %v454
    %v595 = vpop.f32.mrb[0].mxu0
    %v596 = vadd.f32 %v482, %v595
    %v597 = vpop.f32.mrb[0].mxu0
    %598 = vmatprep.mubr.f32.mxu0 0.0
    %599 = vmatmul.mubr.f32.gmra.mrb[0].mxu0 %v455
    %v600 = vpop.f32.mrb[0].mxu0
    %v601 = vadd.f32 %v482, %v600
    %v602 = vpop.f32.mrb[0].mxu0
    %603 = vmatprep.mubr.f32.mxu0 0.0
    %604 = vmatmul.mubr.f32.gmra.mrb[0].mxu0 %v456
    %v605 = vpop.f32.mrb[0].mxu0
    %v606 = vadd.f32 %v482, %v605
    %v607 = vpop.f32.mrb[0].mxu0
    %608 = vmatprep.mubr.f32.mxu0 0.0
    %609 = vmatmul.mubr.f32.gmra.mrb[0].mxu0 %v457
    %v610 = vpop.f32.mrb[0].mxu0
    %v611 = vadd.f32 %v482, %v610
    %v612 = vpop.f32.mrb[0].mxu0
    %613 = vmatprep.mubr.f32.mxu0 0.0
    %614 = vmatmul.mubr.f32.gmra.mrb[0].mxu0 %v458
    %v615 = vpop.f32.mrb[0].mxu0
    %v616 = vadd.f32 %v482, %v615
    %v617 = vpop.f32.mrb[0].mxu0
    %618 = vmatprep.mubr.f32.mxu0 0.0
    %619 = vmatmul.mubr.f32.gmra.mrb[0].mxu0 %v459
    %v620 = vpop.f32.mrb[0].mxu0
    %v621 = vadd.f32 %v482, %v620
    %v622 = vpop.f32.mrb[0].mxu0
    %623 = vmatprep.mubr.f32.mxu0 0.0
    %624 = vmatmul.mubr.f32.gmra.mrb[0].mxu0 %v460
    %v625 = vpop.f32.mrb[0].mxu0
    %v626 = vadd.f32 %v482, %v625
    %v627 = vpop.f32.mrb[0].mxu0
    %628 = vdwg.mxu0
    %v629 = vmax.f32 %v551, 0.0
    %v630 = vmax.f32 %v556, 0.0
    %v631 = vmax.f32 %v561, 0.0
    %v632 = vmax.f32 %v566, 0.0
    %v633 = vmax.f32 %v571, 0.0
    %v634 = vmax.f32 %v576, 0.0
    %v635 = vmax.f32 %v581, 0.0
    %v636 = vmax.f32 %v586, 0.0
    %v637 = vmax.f32 %v591, 0.0
    %v638 = vmax.f32 %v596, 0.0
    %v639 = vmax.f32 %v601, 0.0
    %v640 = vmax.f32 %v606, 0.0
    %v641 = vmax.f32 %v611, 0.0
    %v642 = vmax.f32 %v616, 0.0
    %v643 = vmax.f32 %v621, 0.0
    %v644 = vmax.f32 %v626, 0.0
    %645 = vst [vmem:[%s5] sm:$0xff] %v629
    %646 = vst [vmem:[%s5 + $0x8] sm:$0xff] %v630
    %647 = vst [vmem:[%s5 + $0x10] sm:$0xff] %v631
    %648 = vst [vmem:[%s5 + $0x18] sm:$0xff] %v632
    %649 = vst [vmem:[%s5 + $0x20] sm:$0xff] %v633
    %650 = vst [vmem:[%s5 + $0x28] sm:$0xff] %v634
    %651 = vst [vmem:[%s5 + $0x30] sm:$0xff] %v635
    %652 = vst [vmem:[%s5 + $0x38] sm:$0xff] %v636
    %653 = vst [vmem:[%s5 + $0x40] sm:$0xff] %v637
    %654 = vst [vmem:[%s5 + $0x48] sm:$0xff] %v638
    %655 = vst [vmem:[%s5 + $0x50] sm:$0xff] %v639
    %656 = vst [vmem:[%s5 + $0x58] sm:$0xff] %v640
    %657 = vst [vmem:[%s5 + $0x60] sm:$0xff] %v641
    %658 = vst [vmem:[%s5 + $0x68] sm:$0xff] %v642
    %659 = vst [vmem:[%s5 + $0x70] sm:$0xff] %v643
    %660 = vst [vmem:[%s5 + $0x78] sm:$0xff] %v644
  $region29: #{encoder_forward.2} parent=0 // pred_fallthru
    _
  // Predicated region
  $region30: #{encoder_forward.2} parent=0 // pred_check
    _
  $region31: #{encoder_forward.2} parent=0 // pred_check_branch
    %662 = sbr.rel (0) target = $region33
  $region32: #{encoder_forward.2} parent=0 // pred_region
    _
  $region33: #{encoder_forward.2} parent=0 // pred_fallthru
    _
  // Predicated region
  $region34: #{encoder_forward.2} parent=0 // pred_check
    _
  $region35: #{encoder_forward.2} parent=0 // pred_check_branch
    %664 = sbr.rel (0) target = $region37
  $region36: #{encoder_forward.2} parent=0 // pred_region
    _
  $region37: #{encoder_forward.2} parent=0 // pred_fallthru
    _

</llo_original>
